<compile_context>
chip_gen: v7x
topology: tpu7x:2x2x1
jax: 0.10.0
libtpu: 0.0.40
codegen_flags: <defaults>
</compile_context>

<pallas_src>
import jax
import jax.numpy as jnp
from jax.experimental import pallas as pl
from jax.experimental.pallas import tpu as pltpu


# ----------------------------- kernel body ---------------------------------


def _droppath_kernel(scale_ref, x_ref, o_ref):
    # scale_ref: (rows_pad, 1) f32 per-row scale (0.0 or 1/keep_prob), resident
    #            in VMEM for the whole grid (constant index_map).
    # x_ref / o_ref: (TM, LANES) tile in the input dtype.
    tm = x_ref.shape[0]
    if scale_ref.shape[0] == tm:                      # single-block grid
        scale = scale_ref[...]
    else:
        start = pl.multiple_of(pl.program_id(0) * tm, tm)
        scale = scale_ref[pl.ds(start, tm), :]        # (TM, 1)
    # f32 multiply (exact vs the reference), cast back to the input dtype.
    o_ref[...] = (x_ref[...].astype(jnp.float32) * scale).astype(o_ref.dtype)


# ----------------------------- tiling helpers ------------------------------


def _largest_divisor(n, step, limit):
    """Largest multiple-of-`step` divisor of n that is <= limit (or None)."""
    best = None
    d = step
    lim = min(n, limit)
    while d <= lim:
        if n % d == 0:
            best = d
        d += step
    return best


def _choose_layout(feat, max_lanes):
    """Pick (lanes, pad_feat): lanes % 128 == 0 whenever possible, pad_feat >= feat."""
    lanes = _largest_divisor(feat, 128, max_lanes)
    if lanes is not None:
        return lanes, feat
    lanes = _largest_divisor(feat, 8, max_lanes)
    if lanes is not None and lanes >= 512:
        return lanes, feat                            # wide mult-of-8 last dim, no pad copy
    pad_feat = -(-feat // 128) * 128                  # pad to a multiple of 128, slice after
    return _largest_divisor(pad_feat, 128, max_lanes), pad_feat


def _choose_row_block(rows, lanes, itemsize, max_tile_bytes):
    """TM: multiple of the sublane packing, sized by the byte budget only, and
    capped just enough to keep >=2 grid steps (>=4 when the tile stays >=2 MiB)."""
    sub = max(8, 32 // max(1, itemsize))              # f32: 8, bf16: 16, int8/fp8: 32
    if rows <= sub:
        return rows                                   # full-extent block (always legal)
    byte_cap = max(1, max_tile_bytes // max(1, lanes * itemsize))
    tm = min(rows, byte_cap)
    for min_steps, min_tile_bytes in ((4, 2 << 20), (2, 0)):
        cap = -(-rows // min_steps)
        if cap * lanes * itemsize >= min_tile_bytes:
            tm = min(tm, cap)
            break
    tm = max(sub, (tm // sub) * sub)
    return min(tm, rows)


def _sample_uniform(key, batch):
    # Single source of truth for the per-sample uniforms (always f32), shared
    # by the kernel wrapper and the pure-JAX reference.
    return jax.random.uniform(key, (batch,), dtype=jnp.float32)


# ----------------------------- public wrapper -------------------------------


def drop_path(x, key, drop_prob=0.3, training=True, *,
              max_lanes=8192, max_tile_bytes=8 * 1024 * 1024):
    """DropPath forward. x: (B, ...) float array, per-sample stochastic depth."""
    if (not training) or drop_prob == 0.0:
        return x
    if drop_prob >= 1.0:
        raise ValueError("drop_prob must be < 1.0 (keep_prob would be 0).")
    keep_prob = 1.0 - float(drop_prob)

    orig_shape = x.shape
    B = int(orig_shape[0])
    feat = 1
    for d in orig_shape[1:]:
        feat *= int(d)

    max_lanes = max(128, int(max_lanes))
    # Keep 2x double-buffered (in + out) tiles comfortably under v7x's 64 MiB VMEM.
    max_tile_bytes = max(64 * 1024, min(int(max_tile_bytes), 10 << 20))

    # Lane-dense 2D view (rows, lanes); pad the feature dim when it has no
    # 128-friendly factorization instead of emitting masked stores.
    lanes, pad_feat = _choose_layout(feat, max_lanes)
    xf = x.reshape(B, feat)
    if pad_feat != feat:
        xf = jnp.pad(xf, ((0, 0), (0, pad_feat - feat)))
    rps = pad_feat // lanes                           # rows per sample
    rows = B * rps
    xf = xf.reshape(rows, lanes)

    # Per-sample Bernoulli(keep_prob) scale in f32: 0.0 or 1/keep_prob.
    u = _sample_uniform(key, B)
    scale_b = jnp.floor(keep_prob + u) * (1.0 / keep_prob)

    itemsize = jnp.dtype(x.dtype).itemsize
    tm = _choose_row_block(rows, lanes, itemsize, max_tile_bytes)
    nblk = pl.cdiv(rows, tm)
    rows_pad = nblk * tm

    # Per-row scale column, padded to rows_pad so the in-kernel pl.ds slice of
    # the resident block never reads out of bounds.
    scale_col = jnp.repeat(scale_b, rps)
    if rows_pad != rows:
        scale_col = jnp.pad(scale_col, (0, rows_pad - rows))
    scale_col = scale_col.reshape(rows_pad, 1)

    # Explicit VMEM budget: 2 buffers x (x tile + out tile) + 2 x scale column + headroom.
    tile_bytes = tm * lanes * itemsize
    needed = 4 * tile_bytes + 2 * rows_pad * 4
    vmem_limit = int(min(max(needed + (8 << 20), 16 << 20), 56 << 20))

    out = pl.pallas_call(
        _droppath_kernel,
        out_shape=jax.ShapeDtypeStruct((rows, lanes), x.dtype),
        grid=(nblk,),
        in_specs=[
            pl.BlockSpec((rows_pad, 1), lambda i: (0, 0)),    # resident scale column
            pl.BlockSpec((tm, lanes), lambda i: (i, 0)),      # x row-block
        ],
        out_specs=pl.BlockSpec((tm, lanes), lambda i: (i, 0)),
        input_output_aliases={1: 0},                          # out reuses xf's HBM
        compiler_params=pltpu.CompilerParams(
            dimension_semantics=("parallel",),
            vmem_limit_bytes=vmem_limit,
        ),
    )(scale_col, xf)

    out = out.reshape(B, pad_feat)
    if pad_feat != feat:
        out = out[:, :feat]
    return out.reshape(orig_shape)


# ----------------------------- reference ------------------------------------


def drop_path_reference(x, key, drop_prob):
    """Pure-JAX reference with the PyTorch forward semantics."""
    keep_prob = 1.0 - float(drop_prob)
    B = x.shape[0]
    u = _sample_uniform(key, B)
    scale = (jnp.floor(keep_prob + u) * (1.0 / keep_prob)).reshape(
        (B,) + (1,) * (x.ndim - 1))
    return (x.astype(jnp.float32) * scale).astype(x.dtype)


# ----------------------------- demo / self-test ------------------------------


if __name__ == "__main__":
    keys = jax.random.split(jax.random.PRNGKey(0), 10)
    dp = 0.1   # SA uses drop_path_ratio=0.1

    def check(y, y_ref, tol, name):
        assert y.shape == y_ref.shape and y.dtype == y_ref.dtype, name
        assert jnp.allclose(y.astype(jnp.float32), y_ref.astype(jnp.float32),
                            atol=tol, rtol=tol), f"mismatch vs reference ({name})"

    # 1) (B, N, C) token activation as seen by drop_path inside a Block.
    x1 = jax.random.normal(keys[0], (2, 8, 128), dtype=jnp.float32)
    y1 = jax.block_until_ready(drop_path(x1, keys[1], dp, training=True))
    check(y1, drop_path_reference(x1, keys[1], dp), 1e-6, "f32 single-block")

    # 2) Multi-step grid with a trailing partial row block + resident-scale slicing.
    x2 = jax.random.normal(keys[2], (2, 9, 128), dtype=jnp.float32)
    y2 = jax.block_until_ready(
        drop_path(x2, keys[3], dp, training=True,
                  max_lanes=128, max_tile_bytes=4 * 1024))
    check(y2, drop_path_reference(x2, keys[3], dp), 1e-6, "partial row block")

    # 3) bf16: 16-row sublane packing, 2-step grid.
    x3 = jax.random.normal(keys[4], (2, 64, 128), dtype=jnp.bfloat16)
    y3 = jax.block_until_ready(
        drop_path(x3, keys[5], dp, training=True, max_lanes=128))
    check(y3, drop_path_reference(x3, keys[5], dp), 1e-2, "bf16")

    # 4) Feature dim not a multiple of 128 -> lane-padding path.
    x4 = jax.random.normal(keys[6], (2, 9, 32), dtype=jnp.float32)
    y4 = jax.block_until_ready(drop_path(x4, keys[7], dp, training=True))
    check(y4, drop_path_reference(x4, keys[7], dp), 1e-6, "padded lanes")

    # 5) Eval mode and drop_prob == 0 are identity.
    assert jnp.array_equal(drop_path(x1, keys[8], dp, training=False), x1)
    assert jnp.array_equal(drop_path(x1, keys[9], 0.0, training=True), x1)

    print("KERNEL_OK")
</pallas_src>

<mosaic_0001>
module attributes {stable_mosaic.version = 11 : i64} {
  func.func @_droppath_kernel(%arg0: i32, %arg1: memref<2x1xf32, #tpu.memory_space<vmem>>, %arg2: memref<2x1024xf32, #tpu.memory_space<vmem>>, %arg3: memref<2x1024xf32, #tpu.memory_space<vmem>>) attributes {dimension_semantics = [#tpu.dimension_semantics<parallel>], iteration_bounds = array<i64: 1>, scalar_prefetch = 0 : i64, scratch_operands = 0 : i64, tpu.core_type = #tpu.core_type<tc>, window_params = [{pipeline_mode = #tpu.pipeline_mode<synchronous>, transform_indices = @transform_0, window_bounds = array<i64: 2, 1>}, {transform_indices = @transform_1, window_bounds = array<i64: 2, 1024>}, {transform_indices = @transform_2, window_bounds = array<i64: 2, 1024>}]} {
    %c0 = arith.constant 0 : index
    %c0_0 = arith.constant 0 : index
    %0 = vector.load %arg1[%c0, %c0_0] : memref<2x1xf32, #tpu.memory_space<vmem>>, vector<2x1xf32>
    %c0_1 = arith.constant 0 : index
    %c0_2 = arith.constant 0 : index
    %1 = vector.load %arg2[%c0_1, %c0_2] : memref<2x1024xf32, #tpu.memory_space<vmem>>, vector<2x1024xf32>
    %2 = vector.broadcast %0 : vector<2x1xf32> to vector<2x1024xf32>
    %3 = arith.mulf %1, %2 : vector<2x1024xf32>
    %c0_3 = arith.constant 0 : index
    %c0_4 = arith.constant 0 : index
    %4 = vector.load %arg3[%c0_3, %c0_4] : memref<2x1024xf32, #tpu.memory_space<vmem>>, vector<2x1024xf32>
    tpu.vector_store %arg3[%c0_3, %c0_4], %3 {strides = array<i32>} : memref<2x1024xf32, #tpu.memory_space<vmem>>, vector<2x1024xf32>,
    return
  }
  func.func @transform_0(%arg0: i32) -> (i32, i32) {
    %c0_i32 = arith.constant 0 : i32
    %c0_i32_0 = arith.constant 0 : i32
    %c0_i32_1 = arith.constant 0 : i32
    return %c0_i32, %c0_i32_0 : i32, i32
  }
  func.func @transform_1(%arg0: i32) -> (i32, i32) {
    %c0_i32 = arith.constant 0 : i32
    %c0_i32_0 = arith.constant 0 : i32
    return %arg0, %c0_i32 : i32, i32
  }
  func.func @transform_2(%arg0: i32) -> (i32, i32) {
    %c0_i32 = arith.constant 0 : i32
    %c0_i32_0 = arith.constant 0 : i32
    return %arg0, %c0_i32 : i32, i32
  }
}

</mosaic_0001>

<llo_original>
// kernel: tpu_custom_call.1
$region0: #{tpu_custom_call.1}
  #allocation0 [shape = 'u32[]', space=smem, size = 0x4, offset = 0x4, fixed_abs, tag = 'smem constant byte address 0x4 - core index']
  #allocation1 [shape = 'u32[144,128]{1,0:T(1,128)}', space=vmem, size = 0x12000, scoped, tag = 'internal scratch']
  %s0 = inlined_call_operand.vmem [shape: f32[2,1], index: 0, kind: input, shape index: {}]
  %s1 = inlined_call_operand.hbm [shape: f32[2,1024], index: 1, kind: input, shape index: {}, may-alias: {1,2}]
  %s2 = inlined_call_operand.hbm [shape: f32[2,1024], index: 2, kind: output, shape index: {}, may-alias: {1,2}]
  %s3 = sld [smem:[#allocation0]]
  $region22: #{tpu_custom_call.1} parent=0
    _
  %s5 = ssub.s32 1, %s3
  %s6 = scalar_select 0, %s5, %s3
  $region1: #{tpu_custom_call.1} parent=0
    #allocation2 [shape = 'u8[8192]{0}', space=vmem, size = 0x2000, scoped, tag = 'input window, operand 1, single buffered']
    #allocation3 [shape = 's32[1]{0}', space=sflag, size = 0x4, scoped, tag = 'scoped memory for tpu_custom_call.1']
    #allocation4 [shape = 's32[1]{0}', space=sflag, size = 0x4, scoped, tag = 'scoped memory for tpu_custom_call.1']
    #allocation5 [shape = 'u8[8192]{0}', space=vmem, size = 0x2000, scoped, tag = 'output window, operand 0, single buffered']
    %7 = vsyncpa [#allocation3], 0
    %8 = vsyncpa [#allocation4], 0
    // Predicated region
    $region2: #{tpu_custom_call.1} parent=1 // pred_check
      _
    $region3: #{tpu_custom_call.1} parent=1 // pred_check_branch
      %10 = sbr.rel (0) target = $region5
    $region4: #{tpu_custom_call.1} parent=1 // pred_region
      _
    $region5: #{tpu_custom_call.1} parent=1 // pred_fallthru
      _
    // Predicated region
    $region6: #{tpu_custom_call.1} parent=1 // pred_check
      _
    $region7: #{tpu_custom_call.1} parent=1 // pred_check_branch
      %12 = sbr.rel (0) target = $region9
    $region8: #{tpu_custom_call.1} parent=1 // pred_region
      %s14 = ssub.s32 256, 256
      %15 = vsyncadd [#allocation3], %s14
      %s17 = sshll.u32 [#allocation2], 4
      %s18 = int_to_ptr.vmem [resolvable:$true] %s17
      %20 = dma.hbm_to_vmem [thread:$0]  %s1, 256, %s18, [#allocation3]
    $region9: #{tpu_custom_call.1} parent=1 // pred_fallthru
      _
    // Predicated region
    $region10: #{tpu_custom_call.1} parent=1 // pred_check
      _
    $region11: #{tpu_custom_call.1} parent=1 // pred_check_branch
      %22 = sbr.rel (0) target = $region13
    $region12: #{tpu_custom_call.1} parent=1 // pred_region
      %23 = dma.done [#allocation3], 256
    $region13: #{tpu_custom_call.1} parent=1 // pred_fallthru
      _
    %v24 = vld [vmem:[%s0] sm:$0x3]
    %v25 = vld [vmem:[#allocation2] sm:$0xff]
    %v26 = vld [vmem:[#allocation2 + $0x8] sm:$0xff]
    %28 = vset.pattern.permute.xlu0 0
    %29 = vperm.xlu0 %28, %v24
    %v30 = vpop.permute.xlu0 %29
    %v32 = vunpack.c.l.s4 269488144
    %v33 = vunpack.c.0.s8 %v32
    %v34 = vlaneseq
    %v35 = vshrl.u32 %v34, 7
    %v36 = vsub.s32 %v33, %v35
    %v37 = vrot.slane %v30, %v36
    %v39 = vmul.f32 %v25, %v37
    %v40 = vmul.f32 %v26, %v37
    %41 = vst [vmem:[#allocation5] sm:$0xff] %v39
    %42 = vst [vmem:[#allocation5 + $0x8] sm:$0xff] %v40
    // Predicated region
    $region14: #{tpu_custom_call.1} parent=1 // pred_check
      _
    $region15: #{tpu_custom_call.1} parent=1 // pred_check_branch
      %44 = sbr.rel (0) target = $region17
    $region16: #{tpu_custom_call.1} parent=1 // pred_region
      %s46 = ssub.s32 256, 256
      %47 = vsyncadd [#allocation4], %s46
      %s49 = sshll.u32 [#allocation5], 4
      %s50 = int_to_ptr.vmem [resolvable:$true] %s49
      %52 = dma.vmem_to_hbm [thread:$0]  %s50, 256, %s2, [#allocation4]
    $region17: #{tpu_custom_call.1} parent=1 // pred_fallthru
      _
    // Predicated region
    $region18: #{tpu_custom_call.1} parent=1 // pred_check
      _
    $region19: #{tpu_custom_call.1} parent=1 // pred_check_branch
      %54 = sbr.rel (0) target = $region21
    $region20: #{tpu_custom_call.1} parent=1 // pred_region
      %55 = dma.done [#allocation4], 256
    $region21: #{tpu_custom_call.1} parent=1 // pred_fallthru
      _
    %56 = vsyncpa [#allocation3], 1
    %57 = vsyncpa [#allocation4], 1

</llo_original>
